<compile_context>
chip_gen: v6e
topology: v6e:2x2x1
jax: 0.10.0
libtpu: 0.0.40
codegen_flags: <defaults>
</compile_context>

<pallas_src>
import jax
import jax.numpy as jnp
from jax.experimental import pallas as pl
from jax.experimental.pallas import tpu as pltpu

# Cl(1,3) blade grades for the 16-dim multivector basis
# [1, e0..e3, e01..e23, e012..e123, e0123]
GRADE_OF_BLADE = [0] + [1] * 4 + [2] * 6 + [3] * 4 + [4]


# ----------------------------- JAX glue (embedding) -----------------------------

def embed_vector(x):
    """gatr.embed_vector: place the 4-vector into blades 1..4 of a 16-dim multivector."""
    B, N, _ = x.shape
    mv = jnp.zeros((B, N, 16), dtype=x.dtype)
    return mv.at[..., 1:5].set(x)


def encode_tokens(type_token, global_token, token_size, batchsize):
    """One-hot type tokens (B, N, S) and global token (B, 1, S)   (isgatr=True)."""
    tt = jax.nn.one_hot(jnp.asarray(type_token, jnp.int32), token_size, dtype=jnp.float32)
    tt = jnp.broadcast_to(tt[None], (batchsize,) + tt.shape)
    gt = jax.nn.one_hot(jnp.asarray(global_token, jnp.int32), token_size, dtype=jnp.float32)
    gt = jnp.broadcast_to(gt[None, None, :], (batchsize, 1, token_size))
    return tt, gt


def embed_into_ga(inputs, type_token, global_token, token_size):
    B, N, _ = inputs.shape
    mv = embed_vector(inputs)                                   # (B, N, 16)
    tt, gt = encode_tokens(type_token, global_token, token_size, B)
    global_token_mv = jnp.zeros((B, 1, 16), dtype=mv.dtype)
    mv = jnp.concatenate([global_token_mv, mv], axis=1)         # (B, T=N+1, 16)
    scalars = jnp.concatenate([gt, tt], axis=1)                 # (B, T, S)
    return mv, scalars


# ----------------------------- Pallas kernel (net + extract) -----------------------------

def _gatr_global_token_kernel(feat_ref, w1t_ref, b1t_ref, wout_ref, wblade_ref, amp_ref):
    """One batch tile, features on sublanes and batch on the 128-lane axis.

    feat_ref   : (C_pad, tile_b) bf16   row 0 = mv scalar blade, rows 1.. = scalar channels
    w1t_ref    : (H, C_pad)      bf16   [w_mv2s ; w1]^T  (zero-padded rows)
    b1t_ref    : (H, 1)          f32
    wout_ref   : (H, 1)          f32    hidden -> scalar-blade weights
    wblade_ref : (1, 1)          f32    per-grade weight of the scalar blade (grade 0)
    amp_ref    : (1, tile_b)     f32    amplitude, batch on lanes (lane-dense store)
    """
    feat = feat_ref[...]                                        # (C_pad, tile_b) bf16
    # Hidden pre-activation on the MXU: (H, C) @ (C, tile_b) -> (H, tile_b),
    # batch on the lane/N axis, f32 accumulation.
    h = jnp.dot(w1t_ref[...], feat, preferred_element_type=jnp.float32)
    h = h + b1t_ref[...]                                        # lane-broadcast (H, 1)
    h = jax.nn.gelu(h, approximate=True)                        # f32 (v5e has no bf16 VPU/EUP)

    # hidden -> amplitude: VPU multiply + sublane reduction instead of an MXU
    # matmul producing a single output column.
    amp = jnp.sum(h * wout_ref[...], axis=0, keepdims=True)     # (1, tile_b)
    # equivariant skip: scalar blade of (mv * w_blade)  (zero for the global token,
    # kept for structural fidelity of the synthetic net).
    amp = amp + wblade_ref[...] * feat[0:1, :].astype(jnp.float32)
    amp_ref[...] = amp


def _pick_tile_b(batch):
    tile = 128
    while tile * 2 <= batch and tile < 4096:
        tile *= 2
    return tile


def amplitude_gatr_forward(inputs, type_token, global_token, token_size, params):
    B = inputs.shape[0]
    mv, scalars = embed_into_ga(inputs, type_token, global_token, token_size)   # (B,T,16),(B,T,S)

    w_blade, w1, b1, w_mv2s, w_h2mv = params
    H = w1.shape[1]
    assert w_h2mv.shape[1] == 1, "synthetic head emits a single amplitude channel"

    # TODO(synk): the injected `net` in the original module is an arbitrary L-GATr
    # stack; the synthetic block used here is strictly per-token, so only the
    # global-token rows (item 0) can influence extract_from_ga's output and the
    # kernel is restricted to those B rows.  A real attention-based L-GATr would
    # instead need an M-tiled grid over all B*(N+1) tokens.

    # Global-token row of every batch element, indexed directly on the (B, T, ...)
    # arrays (no flattened-stride assumption): mv scalar blade + scalar channels.
    feat = jnp.concatenate([mv[:, 0, 0:1], scalars[:, 0, :]], axis=-1)          # (B, C)
    C = feat.shape[-1]

    # Transposed, lane-dense layout: batch on the 128-lane axis; pad the feature
    # axis to a packed bf16 sublane tile and the batch to a whole lane tile.
    tile_b = _pick_tile_b(B)
    b_pad = ((B + tile_b - 1) // tile_b) * tile_b
    c_pad = ((C + 15) // 16) * 16
    feat_t = jnp.pad(feat.T, ((0, c_pad - C), (0, b_pad - B))).astype(jnp.bfloat16)  # (c_pad, b_pad)

    # Weights: pre-composed / transposed once, tiny and grid-resident.
    w1_aug = jnp.concatenate([w_mv2s, w1], axis=0)                               # (C, H)
    w1_aug = jnp.pad(w1_aug, ((0, c_pad - C), (0, 0)))                           # (c_pad, H)
    w1_aug_t = w1_aug.T.astype(jnp.bfloat16)                                     # (H, c_pad)
    b1_t = b1.T.astype(jnp.float32)                                              # (H, 1)
    w_out = w_h2mv.astype(jnp.float32)                                           # (H, 1)
    w_blade0 = w_blade[:, 0:1].astype(jnp.float32)                               # (1, 1)

    grid = (b_pad // tile_b,)
    amp_t = pl.pallas_call(
        _gatr_global_token_kernel,
        out_shape=jax.ShapeDtypeStruct((1, b_pad), jnp.float32),
        grid_spec=pltpu.PrefetchScalarGridSpec(
            num_scalar_prefetch=0,
            grid=grid,
            in_specs=[
                pl.BlockSpec((c_pad, tile_b), lambda i: (0, i)),   # features, tiled over batch
                pl.BlockSpec((H, c_pad), lambda i: (0, 0)),        # weights resident
                pl.BlockSpec((H, 1), lambda i: (0, 0)),
                pl.BlockSpec((H, 1), lambda i: (0, 0)),
                pl.BlockSpec((1, 1), lambda i: (0, 0)),
            ],
            out_specs=pl.BlockSpec((1, tile_b), lambda i: (0, i)),
        ),
        compiler_params=pltpu.CompilerParams(
            dimension_semantics=("parallel",),          # batch tiles split across TCs (v7x)
            vmem_limit_bytes=32 * 1024 * 1024,          # safe on v7x's 64 MiB VMEM
        ),
    )(feat_t, w1_aug_t, b1_t, w_out, w_blade0)

    return amp_t[:, :B].T                                                        # (B, 1)


# ----------------------------- deterministic synthetic net params -----------------------------

def init_params(token_size, hidden, seed=1):
    keys = jax.random.split(jax.random.PRNGKey(seed), 5)
    grade_w = jax.random.normal(keys[0], (5,), jnp.float32)
    w_blade = grade_w[jnp.asarray(GRADE_OF_BLADE, jnp.int32)][None, :]           # (1, 16)
    w1 = jax.random.normal(keys[1], (token_size, hidden), jnp.float32) / jnp.sqrt(token_size)
    b1 = 0.1 * jax.random.normal(keys[2], (1, hidden), jnp.float32)
    w_mv2s = jax.random.normal(keys[3], (1, hidden), jnp.float32)
    w_h2mv = jax.random.normal(keys[4], (hidden, 1), jnp.float32) / jnp.sqrt(hidden)
    return (w_blade, w1, b1, w_mv2s, w_h2mv)


# ----------------------------- pure-JAX reference -----------------------------

def reference_forward(inputs, type_token, global_token, token_size, params):
    """Full-token pure-JAX reference of the wrapper forward (no Pallas)."""
    mv, s = embed_into_ga(inputs, type_token, global_token, token_size)          # (B,T,16),(B,T,S)
    w_blade, w1, b1, w_mv2s, w_h2mv = params
    # Match the kernel's bf16 storage of the two matmul operands (exact for the
    # one-hot / zero features; rounds the weights once), f32 accumulation.
    feat = jnp.concatenate([mv[..., 0:1], s], axis=-1)
    feat = feat.astype(jnp.bfloat16).astype(jnp.float32)
    w1_aug = jnp.concatenate([w_mv2s, w1], axis=0).astype(jnp.bfloat16).astype(jnp.float32)
    h = jnp.einsum("btc,ch->bth", feat, w1_aug,
                   precision=jax.lax.Precision.HIGHEST) + b1
    h = jax.nn.gelu(h, approximate=True)
    scalar_blade = (mv * w_blade)[..., 0:1] + jnp.sum(h * w_h2mv[:, 0], axis=-1, keepdims=True)
    return scalar_blade[:, 0, :]                                                  # (B, 1)


if __name__ == "__main__":
    B, N, token_size, hidden = 2, 5, 8, 32
    type_token = [0, 0, 1, 2, 3]        # one per particle
    global_token = 0

    key = jax.random.PRNGKey(0)
    inputs = jax.random.normal(key, (B, N, 4), jnp.float32)     # 4-momenta
    params = init_params(token_size, hidden)

    amp = amplitude_gatr_forward(inputs, type_token, global_token, token_size, params)
    amp = jax.block_until_ready(amp)

    ref = reference_forward(inputs, type_token, global_token, token_size, params)
    assert amp.shape == (B, 1), amp.shape
    assert jnp.allclose(amp, ref, atol=1e-4, rtol=1e-4), (amp, ref)
    print("KERNEL_OK")
</pallas_src>

<mosaic_0001>
module attributes {stable_mosaic.version = 11 : i64} {
  func.func @_gatr_global_token_kernel(%arg0: i32, %arg1: memref<16x128xbf16, #tpu.memory_space<vmem>>, %arg2: memref<32x16xbf16, #tpu.memory_space<vmem>>, %arg3: memref<32x1xf32, #tpu.memory_space<vmem>>, %arg4: memref<32x1xf32, #tpu.memory_space<vmem>>, %arg5: memref<1x1xf32, #tpu.memory_space<vmem>>, %arg6: memref<1x128xf32, #tpu.memory_space<vmem>>) attributes {dimension_semantics = [#tpu.dimension_semantics<parallel>], iteration_bounds = array<i64: 1>, scalar_prefetch = 0 : i64, scratch_operands = 0 : i64, tpu.core_type = #tpu.core_type<tc>, window_params = [{transform_indices = @transform_0, window_bounds = array<i64: 16, 128>}, {pipeline_mode = #tpu.pipeline_mode<synchronous>, transform_indices = @transform_1, window_bounds = array<i64: 32, 16>}, {pipeline_mode = #tpu.pipeline_mode<synchronous>, transform_indices = @transform_2, window_bounds = array<i64: 32, 1>}, {pipeline_mode = #tpu.pipeline_mode<synchronous>, transform_indices = @transform_3, window_bounds = array<i64: 32, 1>}, {pipeline_mode = #tpu.pipeline_mode<synchronous>, transform_indices = @transform_4, window_bounds = array<i64: 1, 1>}, {transform_indices = @transform_5, window_bounds = array<i64: 1, 128>}]} {
    %c0 = arith.constant 0 : index
    %c0_0 = arith.constant 0 : index
    %0 = vector.load %arg1[%c0, %c0_0] : memref<16x128xbf16, #tpu.memory_space<vmem>>, vector<16x128xbf16>
    %c0_1 = arith.constant 0 : index
    %c0_2 = arith.constant 0 : index
    %1 = vector.load %arg2[%c0_1, %c0_2] : memref<32x16xbf16, #tpu.memory_space<vmem>>, vector<32x16xbf16>
    %cst = arith.constant dense<0.000000e+00> : vector<32x128xf32>
    %2 = tpu.matmul %1, %0, %cst {dimension_numbers = #tpu.dot_dimension_numbers<[1], [0], [0], [1], [0, 0, 1, 1], [], []>} : vector<32x16xbf16>, vector<16x128xbf16>, vector<32x128xf32> -> vector<32x128xf32>
    %c0_3 = arith.constant 0 : index
    %c0_4 = arith.constant 0 : index
    %3 = vector.load %arg3[%c0_3, %c0_4] : memref<32x1xf32, #tpu.memory_space<vmem>>, vector<32x1xf32>
    %4 = vector.broadcast %3 : vector<32x1xf32> to vector<32x128xf32>
    %5 = arith.addf %2, %4 : vector<32x128xf32>
    %6 = arith.mulf %5, %5 : vector<32x128xf32>
    %7 = arith.mulf %5, %6 : vector<32x128xf32>
    %cst_5 = arith.constant 4.471500e-02 : f32
    %8 = vector.broadcast %cst_5 : f32 to vector<32x128xf32>
    %9 = arith.mulf %8, %7 : vector<32x128xf32>
    %10 = arith.addf %5, %9 : vector<32x128xf32>
    %cst_6 = arith.constant 0.797884583 : f32
    %11 = vector.broadcast %cst_6 : f32 to vector<32x128xf32>
    %12 = arith.mulf %11, %10 : vector<32x128xf32>
    %13 = math.tanh %12 : vector<32x128xf32>
    %cst_7 = arith.constant 1.000000e+00 : f32
    %14 = vector.broadcast %cst_7 : f32 to vector<32x128xf32>
    %15 = arith.addf %14, %13 : vector<32x128xf32>
    %cst_8 = arith.constant 5.000000e-01 : f32
    %16 = vector.broadcast %cst_8 : f32 to vector<32x128xf32>
    %17 = arith.mulf %16, %15 : vector<32x128xf32>
    %18 = arith.mulf %5, %17 : vector<32x128xf32>
    %c0_9 = arith.constant 0 : index
    %c0_10 = arith.constant 0 : index
    %19 = vector.load %arg4[%c0_9, %c0_10] : memref<32x1xf32, #tpu.memory_space<vmem>>, vector<32x1xf32>
    %20 = vector.broadcast %19 : vector<32x1xf32> to vector<32x128xf32>
    %21 = arith.mulf %18, %20 : vector<32x128xf32>
    %cst_11 = arith.constant dense<0.000000e+00> : vector<128xf32>
    %22 = vector.multi_reduction <add>, %21, %cst_11 [0] : vector<32x128xf32> to vector<128xf32>
    %23 = vector.shape_cast %22 : vector<128xf32> to vector<1x128xf32>
    %c0_12 = arith.constant 0 : index
    %c0_13 = arith.constant 0 : index
    %24 = vector.load %arg5[%c0_12, %c0_13] : memref<1x1xf32, #tpu.memory_space<vmem>>, vector<1x1xf32>
    %25 = vector.extract_strided_slice %0 {offsets = [0, 0], sizes = [1, 128], strides = [1, 1]} : vector<16x128xbf16> to vector<1x128xbf16>
    %26 = arith.extf %25 : vector<1x128xbf16> to vector<1x128xf32>
    %27 = vector.broadcast %24 : vector<1x1xf32> to vector<1x128xf32>
    %28 = arith.mulf %27, %26 : vector<1x128xf32>
    %29 = arith.addf %23, %28 : vector<1x128xf32>
    %c0_14 = arith.constant 0 : index
    %c0_15 = arith.constant 0 : index
    %30 = vector.load %arg6[%c0_14, %c0_15] : memref<1x128xf32, #tpu.memory_space<vmem>>, vector<1x128xf32>
    tpu.vector_store %arg6[%c0_14, %c0_15], %29 {strides = array<i32>} : memref<1x128xf32, #tpu.memory_space<vmem>>, vector<1x128xf32>,
    return
  }
  func.func @transform_0(%arg0: i32) -> (i32, i32) {
    %c0_i32 = arith.constant 0 : i32
    %c0_i32_0 = arith.constant 0 : i32
    return %c0_i32, %arg0 : i32, i32
  }
  func.func @transform_1(%arg0: i32) -> (i32, i32) {
    %c0_i32 = arith.constant 0 : i32
    %c0_i32_0 = arith.constant 0 : i32
    %c0_i32_1 = arith.constant 0 : i32
    return %c0_i32, %c0_i32_0 : i32, i32
  }
  func.func @transform_2(%arg0: i32) -> (i32, i32) {
    %c0_i32 = arith.constant 0 : i32
    %c0_i32_0 = arith.constant 0 : i32
    %c0_i32_1 = arith.constant 0 : i32
    return %c0_i32, %c0_i32_0 : i32, i32
  }
  func.func @transform_3(%arg0: i32) -> (i32, i32) {
    %c0_i32 = arith.constant 0 : i32
    %c0_i32_0 = arith.constant 0 : i32
    %c0_i32_1 = arith.constant 0 : i32
    return %c0_i32, %c0_i32_0 : i32, i32
  }
  func.func @transform_4(%arg0: i32) -> (i32, i32) {
    %c0_i32 = arith.constant 0 : i32
    %c0_i32_0 = arith.constant 0 : i32
    %c0_i32_1 = arith.constant 0 : i32
    return %c0_i32, %c0_i32_0 : i32, i32
  }
  func.func @transform_5(%arg0: i32) -> (i32, i32) {
    %c0_i32 = arith.constant 0 : i32
    %c0_i32_0 = arith.constant 0 : i32
    return %c0_i32, %arg0 : i32, i32
  }
}

</mosaic_0001>

<llo_original>
// kernel: tpu_custom_call.1
$region0: #{tpu_custom_call.1}
  #allocation0 [shape = 'u32[]', space=smem, size = 0x4, offset = 0x4, fixed_abs, tag = 'smem constant byte address 0x4 - core index']
  #allocation1 [shape = 'u32[144,128]{1,0:T(1,128)}', space=vmem, size = 0x12000, scoped, tag = 'internal scratch']
  #allocation2 [shape = 'f32[1,1]{1,0:T(1,128)S(1)}', space=vmem, size = 0x200, scoped, tag = 'scoped memory for tpu_custom_call.1']
  %s0 = inlined_call_operand.vmem [shape: bf16[16,128], index: 0, kind: input, shape index: {}]
  %s1 = inlined_call_operand.vmem [shape: bf16[32,16], index: 1, kind: input, shape index: {}]
  %s2 = inlined_call_operand.vmem [shape: f32[32,1], index: 2, kind: input, shape index: {}]
  %s3 = inlined_call_operand.vmem [shape: f32[32,1], index: 3, kind: input, shape index: {}]
  %s4 = inlined_call_operand.<no memory space> [shape: f32[1,1], index: 4, kind: input, shape index: {}]
  %s5 = inlined_call_operand.hbm [shape: f32[1,128], index: 5, kind: output, shape index: {}]
  %s6 = sld [smem:[#allocation0]]
  $region30: #{tpu_custom_call.1} parent=0
    _
  %s8 = ssub.s32 1, %s6
  %s9 = scalar_select 0, %s8, %s6
  %v10 = vstv %s4
  %11 = vst [vmem:[#allocation2] sm:$0x1] %v10
  $region1: #{tpu_custom_call.1} parent=0
    #allocation3 [shape = 'u8[512]{0}', space=vmem, size = 0x400, scoped, tag = 'output window, operand 0, single buffered']
    #allocation4 [shape = 's32[1]{0}', space=sflag, size = 0x4, scoped, tag = 'scoped memory for tpu_custom_call.1']
    %12 = vsyncpa [#allocation4], 0
    // Predicated region
    $region2: #{tpu_custom_call.1} parent=1 // pred_check
      _
    $region3: #{tpu_custom_call.1} parent=1 // pred_check_branch
      %14 = sbr.rel (0) target = $region5
    $region4: #{tpu_custom_call.1} parent=1 // pred_region
      _
    $region5: #{tpu_custom_call.1} parent=1 // pred_fallthru
      _
    // Predicated region
    $region6: #{tpu_custom_call.1} parent=1 // pred_check
      _
    $region7: #{tpu_custom_call.1} parent=1 // pred_check_branch
      %16 = sbr.rel (0) target = $region9
    $region8: #{tpu_custom_call.1} parent=1 // pred_region
      _
    $region9: #{tpu_custom_call.1} parent=1 // pred_fallthru
      _
    // Predicated region
    $region10: #{tpu_custom_call.1} parent=1 // pred_check
      _
    $region11: #{tpu_custom_call.1} parent=1 // pred_check_branch
      %18 = sbr.rel (0) target = $region13
    $region12: #{tpu_custom_call.1} parent=1 // pred_region
      _
    $region13: #{tpu_custom_call.1} parent=1 // pred_fallthru
      _
    // Predicated region
    $region14: #{tpu_custom_call.1} parent=1 // pred_check
      _
    $region15: #{tpu_custom_call.1} parent=1 // pred_check_branch
      %20 = sbr.rel (0) target = $region17
    $region16: #{tpu_custom_call.1} parent=1 // pred_region
      _
    $region17: #{tpu_custom_call.1} parent=1 // pred_fallthru
      _
    // Predicated region
    $region18: #{tpu_custom_call.1} parent=1 // pred_check
      _
    $region19: #{tpu_custom_call.1} parent=1 // pred_check_branch
      %22 = sbr.rel (0) target = $region21
    $region20: #{tpu_custom_call.1} parent=1 // pred_region
      _
    $region21: #{tpu_custom_call.1} parent=1 // pred_fallthru
      _
    %v24 = vld [vmem:[%s0] sm:$0xf]
    %v25 = vld [vmem:[%s0 + $0x4] sm:$0xf]
    %v26 = vld [vmem:[%s1] sm:$0xf]
    %v27 = vld [vmem:[%s1 + $0x4] sm:$0xf]
    %v28 = vld [vmem:[%s1 + $0x8] sm:$0xf]
    %v29 = vld [vmem:[%s1 + $0xc] sm:$0xf]
    %v30 = vld [vmem:[%s2] sm:$0xff]
    %v31 = vld [vmem:[%s2 + $0x8] sm:$0xff]
    %v32 = vld [vmem:[%s2 + $0x10] sm:$0xff]
    %v33 = vld [vmem:[%s2 + $0x18] sm:$0xff]
    %35 = vset.pattern.permute.xlu0 0
    %36 = vperm.xlu0 %35, %v30
    %v37 = vpop.permute.xlu0 %36
    %40 = vset.pattern.permute.xlu0 0
    %41 = vperm.xlu0 %40, %v31
    %v42 = vpop.permute.xlu0 %41
    %45 = vset.pattern.permute.xlu0 0
    %46 = vperm.xlu0 %45, %v32
    %v47 = vpop.permute.xlu0 %46
    %50 = vset.pattern.permute.xlu0 0
    %51 = vperm.xlu0 %50, %v33
    %v52 = vpop.permute.xlu0 %51
    %v58 = vunpack.c.l.b16 %v26
    %v59 = vunpack.c.l.b16 %v27
    %v60 = vunpack.c.l.b16 %v28
    %v61 = vunpack.c.l.b16 %v29
    %v62 = vpack.c.b16 %v59, %v58
    %v63 = vpack.c.b16 %v61, %v60
    %v66 = vunpack.c.l.b16 %v24
    %v67 = vunpack.c.l.b16 %v25
    %v68 = vpack.c.b16 %v67, %v66
    %vm70 = vcmask 130048
    %v72 = vsel %vm70, %v62, 0
    %v75 = vsel %vm70, %v63, 0
    %77 = vmatprep.subr.bf16.mxu0 0
    %78 = vmatpush1.bf16.msra.mxu0 0
    %79 = vmatprep.subr.bf16.mxu0 0
    %80 = vmatpush1.bf16.msra.mxu0 0
    %81 = vmatprep.subr.bf16.mxu0 0
    %82 = vmatpush1.bf16.msra.mxu0 0
    %83 = vmatprep.subr.bf16.mxu0 0
    %84 = vmatpush1.bf16.msra.mxu0 0
    %85 = vmatprep.subr.bf16.mxu0 0
    %86 = vmatpush1.bf16.msra.mxu0 0
    %87 = vmatprep.subr.bf16.mxu0 0
    %88 = vmatpush1.bf16.msra.mxu0 0
    %89 = vmatprep.subr.bf16.mxu0 0
    %90 = vmatpush1.bf16.msra.mxu0 0
    %91 = vmatprep.subr.bf16.mxu0 0
    %92 = vmatpush1.bf16.msra.mxu0 %v68
    %93 = vmatprep.subr.bf16.mxu0 0
    %94 = vmatpush2.bf16.msra.mxu0 0
    %95 = vmatprep.subr.bf16.mxu0 0
    %96 = vmatpush2.bf16.msra.mxu0 0
    %97 = vmatprep.subr.bf16.mxu0 0
    %98 = vmatpush2.bf16.msra.mxu0 0
    %99 = vmatprep.subr.bf16.mxu0 0
    %100 = vmatpush2.bf16.msra.mxu0 0
    %101 = vmatprep.subr.bf16.mxu0 0
    %102 = vmatpush2.bf16.msra.mxu0 0
    %103 = vmatprep.subr.bf16.mxu0 0
    %104 = vmatpush2.bf16.msra.mxu0 0
    %105 = vmatprep.subr.bf16.mxu0 0
    %106 = vmatpush2.bf16.msra.mxu0 0
    %107 = vmatprep.subr.bf16.mxu0 0
    %108 = vmatpush2.bf16.msra.mxu0 0
    %109 = vmatprep.mubr.bf16.mxu0 0
    %110 = vmatmul.mubr.bf16.gmra.mxu0 %v72
    %v111 = vpop.f32.mrf.mxu0
    %v112 = vadd.f32 %v37, %v111
    %v113 = vpop.f32.mrf.mxu0
    %v114 = vpop.f32.mrf.mxu0
    %v115 = vadd.f32 %v42, %v114
    %v116 = vpop.f32.mrf.mxu0
    %117 = vmatprep.mubr.bf16.mxu0 0
    %118 = vmatmul.mubr.bf16.gmra.mxu0 %v75
    %v119 = vpop.f32.mrf.mxu0
    %v120 = vadd.f32 %v47, %v119
    %v121 = vpop.f32.mrf.mxu0
    %v122 = vpop.f32.mrf.mxu0
    %v123 = vadd.f32 %v52, %v122
    %v124 = vpop.f32.mrf.mxu0
    %125 = vdwg.mxu0
    %v126 = vmul.f32 %v112, %v112
    %v127 = vmul.f32 %v115, %v115
    %v128 = vmul.f32 %v120, %v120
    %v129 = vmul.f32 %v123, %v123
    %v130 = vmul.f32 %v112, %v126
    %v131 = vmul.f32 %v115, %v127
    %v132 = vmul.f32 %v120, %v128
    %v133 = vmul.f32 %v123, %v129
    %v134 = vmul.f32 %v130, 0.044715
    %v135 = vmul.f32 %v131, 0.044715
    %v136 = vmul.f32 %v132, 0.044715
    %v137 = vmul.f32 %v133, 0.044715
    %v138 = vadd.f32 %v112, %v134
    %v139 = vadd.f32 %v115, %v135
    %v140 = vadd.f32 %v120, %v136
    %v141 = vadd.f32 %v123, %v137
    %v142 = vmul.f32 %v138, 0.7978846
    %v143 = vmul.f32 %v139, 0.7978846
    %v144 = vmul.f32 %v140, 0.7978846
    %v145 = vmul.f32 %v141, 0.7978846
    %v146 = vtanh.pop %v142
    %v147 = vtanh.pop %v143
    %v148 = vtanh.pop %v144
    %v149 = vtanh.pop %v145
    %v150 = vadd.f32 %v146, 1.0
    %v151 = vadd.f32 %v147, 1.0
    %v152 = vadd.f32 %v148, 1.0
    %v153 = vadd.f32 %v149, 1.0
    %v154 = vmul.f32 %v150, 0.5
    %v155 = vmul.f32 %v151, 0.5
    %v156 = vmul.f32 %v152, 0.5
    %v157 = vmul.f32 %v153, 0.5
    %v158 = vmul.f32 %v112, %v154
    %v159 = vmul.f32 %v115, %v155
    %v160 = vmul.f32 %v120, %v156
    %v161 = vmul.f32 %v123, %v157
    %v162 = vld [vmem:[%s3] sm:$0xff]
    %v163 = vld [vmem:[%s3 + $0x8] sm:$0xff]
    %v164 = vld [vmem:[%s3 + $0x10] sm:$0xff]
    %v165 = vld [vmem:[%s3 + $0x18] sm:$0xff]
    %167 = vset.pattern.permute.xlu0 0
    %168 = vperm.xlu0 %167, %v162
    %v169 = vpop.permute.xlu0 %168
    %172 = vset.pattern.permute.xlu0 0
    %173 = vperm.xlu0 %172, %v163
    %v174 = vpop.permute.xlu0 %173
    %177 = vset.pattern.permute.xlu0 0
    %178 = vperm.xlu0 %177, %v164
    %v179 = vpop.permute.xlu0 %178
    %182 = vset.pattern.permute.xlu0 0
    %183 = vperm.xlu0 %182, %v165
    %v184 = vpop.permute.xlu0 %183
    %v186 = vmul.f32 %v158, %v169
    %v187 = vmul.f32 %v159, %v174
    %v188 = vmul.f32 %v160, %v179
    %v189 = vmul.f32 %v161, %v184
    %v190 = vadd.f32 %v186, %v187
    %v191 = vadd.f32 %v190, %v188
    %v192 = vadd.f32 %v191, %v189
    %v193 = vrot.slane %v192, 4
    %v194 = vadd.f32 %v192, %v193
    %v195 = vrot.slane %v194, 2
    %v196 = vadd.f32 %v194, %v195
    %v197 = vrot.slane %v196, 1
    %v198 = vadd.f32 %v196, %v197
    %v199 = vld [vmem:[#allocation2] sm:$0x1]
    %v200 = vunpack.c.l.bf16 %v24
    %202 = vset.pattern.permute.xlu0 0
    %203 = vperm.xlu0 %202, %v199
    %v204 = vpop.permute.xlu0 %203
    %v206 = vlaneseq
    %v207 = vshrl.u32 %v206, 7
    %v208 = vsub.s32 0, %v207
    %v209 = vrot.slane %v204, %v208
    %v210 = vmul.f32 %v209, %v200
    %v211 = vadd.f32 %v198, %v210
    %212 = vst [vmem:[#allocation3] sm:$0x1] %v211
    // Predicated region
    $region22: #{tpu_custom_call.1} parent=1 // pred_check
      _
    $region23: #{tpu_custom_call.1} parent=1 // pred_check_branch
      %214 = sbr.rel (0) target = $region25
    $region24: #{tpu_custom_call.1} parent=1 // pred_region
      %s216 = ssub.s32 16, 16
      %217 = vsyncadd [#allocation4], %s216
      %s219 = sshll.u32 [#allocation3], 4
      %s220 = int_to_ptr.vmem [resolvable:$true] %s219
      %222 = dma.vmem_to_hbm [thread:$0]  %s220, 16, %s5, [#allocation4]
    $region25: #{tpu_custom_call.1} parent=1 // pred_fallthru
      _
    // Predicated region
    $region26: #{tpu_custom_call.1} parent=1 // pred_check
      _
    $region27: #{tpu_custom_call.1} parent=1 // pred_check_branch
      %224 = sbr.rel (0) target = $region29
    $region28: #{tpu_custom_call.1} parent=1 // pred_region
      %225 = dma.done [#allocation4], 16
    $region29: #{tpu_custom_call.1} parent=1 // pred_fallthru
      _
    %226 = vsyncpa [#allocation4], 1

</llo_original>
